<compile_context>
chip_gen: v6e
topology: v6e:2x2x1
jax: 0.10.0
libtpu: 0.0.40
codegen_flags: <defaults>
</compile_context>

<pallas_src>
import numpy as np
import jax
import jax.numpy as jnp
from jax.experimental import pallas as pl
from jax.experimental.pallas import tpu as pltpu


# --------------------------------------------------------------------------- #
# Positional-encoding table (identical math to the PyTorch __init__).
# --------------------------------------------------------------------------- #
def make_positional_encoding(hidden_dim: int, max_len: int = 1000) -> jnp.ndarray:
    assert hidden_dim % 2 == 0, "hidden_dim must be even (matches PyTorch module)"
    position = np.arange(0, max_len, dtype=np.float32)[:, None]            # [max_len, 1]
    div_term = np.exp(
        np.arange(0, hidden_dim, 2, dtype=np.float32) * (-np.log(10000.0) / hidden_dim)
    )                                                                       # [H/2]
    pe = np.zeros((max_len, hidden_dim), dtype=np.float32)
    pe[:, 0::2] = np.sin(position * div_term)
    pe[:, 1::2] = np.cos(position * div_term)
    return jnp.asarray(pe)                                                  # [max_len, H]


# --------------------------------------------------------------------------- #
# Kernel: plain elementwise add.  Handles both the "batch folded into the block"
# (x 3-D, pe 2-D) and the "batch squeezed" (both 2-D) layouts at trace time.
# --------------------------------------------------------------------------- #
def _add_pe_kernel(x_ref, pe_ref, o_ref):
    x = x_ref[...]
    pe = pe_ref[...]
    if x.ndim == pe.ndim + 1:          # batch folded into the block
        pe = pe[None]
    o_ref[...] = x + pe


# --------------------------------------------------------------------------- #
# Tiling heuristics.
# --------------------------------------------------------------------------- #
def _block_target_bytes(device_kind: str) -> int:
    # v5e: 16 MiB default scoped VMEM -> keep ~2 MiB blocks (already ~85% roofline).
    # v6e / v7x: ~4 MiB blocks capture the 85%+ HBM roofline and still fit the
    # 32 MiB scoped budget (3 streams x 2 buffers x 4 MiB = 24 MiB).
    if "v5" in device_kind:
        return 2 * 1024 * 1024
    return 4 * 1024 * 1024


def _choose_tiles(T: int, NH: int, itemsize: int, target_bytes: int):
    """Pick (T tile, NH tile).  NH tile is a multiple of 128 unless it equals NH;
    T tile is a multiple of the dtype sublane granularity unless it equals T."""
    lane = 128
    sub = 8 * max(1, 4 // max(1, itemsize))      # 8 rows f32, 16 bf16, 32 int8

    # Lane-dim fallback: only tile NH when even `sub` rows of the full NH would
    # blow the block budget (huge N*H case).
    if NH > lane and sub * NH * itemsize > target_bytes:
        tnh = (target_bytes // (sub * itemsize)) // lane * lane
        tnh = int(max(lane, min(tnh, (NH // lane) * lane)))
    else:
        tnh = NH

    if T <= sub:
        tt = T                                    # full dim is always legal
    else:
        tt = target_bytes // max(1, tnh * itemsize)
        tt = int(max(sub, (min(tt, T) // sub) * sub))
        tt = min(tt, T)
    return tt, tnh


def _dim_semantics(grid_sizes, device_kind):
    sem = [pltpu.PARALLEL] * len(grid_sizes)
    if "v7" in device_kind:
        # Engage both v7x TensorCores: plain "parallel" does not split the grid
        # across cores; CORE_PARALLEL on one axis with >= 2 steps does.
        for i, s in enumerate(grid_sizes):
            if s >= 2:
                sem[i] = pltpu.CORE_PARALLEL
                break
    return tuple(sem)


# --------------------------------------------------------------------------- #
# Pallas wrapper: x [B, T, N, H] + pe_slab[:T]  (pe_slab is [max_len, N*H]).
# --------------------------------------------------------------------------- #
def _add_pe(x: jnp.ndarray, pe_slab: jnp.ndarray) -> jnp.ndarray:
    B, T, N, H = x.shape
    NH = N * H
    assert pe_slab.shape[1] == NH and T <= pe_slab.shape[0]
    dtype = x.dtype
    itemsize = jnp.dtype(dtype).itemsize

    device_kind = jax.devices()[0].device_kind.lower()
    target_bytes = _block_target_bytes(device_kind)

    tt, tnh = _choose_tiles(T, NH, itemsize, target_bytes)
    t_tiles = pl.cdiv(T, tt)
    nh_tiles = pl.cdiv(NH, tnh)

    # Lane-dense reshape (trailing dims contiguous: free layout change).
    x2 = x.reshape(B, T, NH)

    # Fold B into the block for small problems (fewer grid steps, ~0.35 us each);
    # otherwise squeeze the batch dim and sweep it innermost so the pe tile stays
    # resident across the batch loop.
    fold_b = B * tt * tnh * itemsize <= target_bytes

    if fold_b:
        grid = (t_tiles, nh_tiles)
        x_spec = pl.BlockSpec((B, tt, tnh), lambda t, n: (0, t, n))
        pe_spec = pl.BlockSpec((tt, tnh), lambda t, n: (t, n))
        o_spec = pl.BlockSpec((B, tt, tnh), lambda t, n: (0, t, n))
        x_block_bytes = B * tt * tnh * itemsize
    else:
        grid = (t_tiles, nh_tiles, B)
        x_spec = pl.BlockSpec((pl.Squeezed(), tt, tnh), lambda t, n, b: (b, t, n))
        pe_spec = pl.BlockSpec((tt, tnh), lambda t, n, b: (t, n))
        o_spec = pl.BlockSpec((pl.Squeezed(), tt, tnh), lambda t, n, b: (b, t, n))
        x_block_bytes = tt * tnh * itemsize

    pe_block_bytes = tt * tnh * itemsize
    # x + out double-buffered, pe double-buffered, plus a little headroom.
    needed = 2 * (2 * x_block_bytes) + 2 * pe_block_bytes
    vmem_limit = int(min(64 << 20, max(32 << 20, needed + (4 << 20))))

    out2 = pl.pallas_call(
        _add_pe_kernel,
        out_shape=jax.ShapeDtypeStruct((B, T, NH), dtype),
        grid_spec=pltpu.PrefetchScalarGridSpec(
            num_scalar_prefetch=0,
            grid=grid,
            in_specs=[x_spec, pe_spec],
            out_specs=o_spec,
        ),
        compiler_params=pltpu.CompilerParams(
            dimension_semantics=_dim_semantics(grid, device_kind),
            vmem_limit_bytes=vmem_limit,
        ),
        # In-place x += pe when the caller donates x at its jit boundary; otherwise
        # XLA inserts a defensive copy (numerically identical).
        input_output_aliases={0: 0},
    )(x2, pe_slab)

    return out2.reshape(B, T, N, H)


# --------------------------------------------------------------------------- #
# Module-like wrapper: builds the [max_len, N*H] pe slab once and caches it per
# (num_nodes, dtype), so the per-call path is a single pallas_call.
# --------------------------------------------------------------------------- #
class TemporalPositionalEncoding:
    def __init__(self, hidden_dim: int, max_len: int = 1000):
        self.hidden_dim = hidden_dim
        self.max_len = max_len
        self.pe = make_positional_encoding(hidden_dim, max_len)    # [max_len, H] f32
        self._slab_cache = {}

    def _slab(self, num_nodes: int, dtype) -> jnp.ndarray:
        # NOTE: pe is cast to x.dtype before the add (for bf16 this differs slightly
        # from a mixed-precision f32 add + downcast; documented, acceptable).
        key = (num_nodes, jnp.dtype(dtype).name)
        slab = self._slab_cache.get(key)
        if slab is None:
            slab = jnp.tile(self.pe.astype(dtype), (1, num_nodes))  # [max_len, N*H]
            self._slab_cache[key] = slab
        return slab

    def __call__(self, x: jnp.ndarray) -> jnp.ndarray:
        B, T, N, H = x.shape
        assert H == self.hidden_dim and T <= self.max_len
        return _add_pe(x, self._slab(N, x.dtype))


# --------------------------------------------------------------------------- #
# Self-test.
# --------------------------------------------------------------------------- #
if __name__ == "__main__":
    # Shapes consistent with forward(): [batch, seq_len, num_nodes, hidden_dim]
    B, T, N, H = 2, 8, 16, 32
    MAX_LEN = 1000

    key = jax.random.PRNGKey(0)
    x = jax.random.normal(key, (B, T, N, H), dtype=jnp.float32)

    module = TemporalPositionalEncoding(H, MAX_LEN)
    out = module(x)
    out = jax.block_until_ready(out)

    # Reference in plain JAX (same semantics as the PyTorch broadcast add).
    ref = x + module.pe[:T][None, :, None, :]
    np.testing.assert_allclose(np.asarray(out), np.asarray(ref), rtol=1e-6, atol=1e-6)

    print("KERNEL_OK")
</pallas_src>

<mosaic_0001>
module attributes {stable_mosaic.version = 11 : i64} {
  func.func @_add_pe_kernel(%arg0: i32, %arg1: i32, %arg2: memref<2x8x512xf32, #tpu.memory_space<vmem>>, %arg3: memref<8x512xf32, #tpu.memory_space<vmem>>, %arg4: memref<2x8x512xf32, #tpu.memory_space<vmem>>) attributes {dimension_semantics = [#tpu.dimension_semantics<parallel>, #tpu.dimension_semantics<parallel>], iteration_bounds = array<i64: 1, 1>, scalar_prefetch = 0 : i64, scratch_operands = 0 : i64, tpu.core_type = #tpu.core_type<tc>, window_params = [{transform_indices = @transform_0, window_bounds = array<i64: 2, 8, 512>}, {transform_indices = @transform_1, window_bounds = array<i64: 8, 512>}, {transform_indices = @transform_2, window_bounds = array<i64: 2, 8, 512>}]} {
    %c0 = arith.constant 0 : index
    %c0_0 = arith.constant 0 : index
    %c0_1 = arith.constant 0 : index
    %0 = vector.load %arg2[%c0, %c0_0, %c0_1] : memref<2x8x512xf32, #tpu.memory_space<vmem>>, vector<2x8x512xf32>
    %c0_2 = arith.constant 0 : index
    %c0_3 = arith.constant 0 : index
    %1 = vector.load %arg3[%c0_2, %c0_3] : memref<8x512xf32, #tpu.memory_space<vmem>>, vector<8x512xf32>
    %2 = vector.shape_cast %1 : vector<8x512xf32> to vector<1x8x512xf32>
    %3 = vector.broadcast %2 : vector<1x8x512xf32> to vector<2x8x512xf32>
    %4 = arith.addf %0, %3 : vector<2x8x512xf32>
    %c0_4 = arith.constant 0 : index
    %c0_5 = arith.constant 0 : index
    %c0_6 = arith.constant 0 : index
    %5 = vector.load %arg4[%c0_4, %c0_5, %c0_6] : memref<2x8x512xf32, #tpu.memory_space<vmem>>, vector<2x8x512xf32>
    tpu.vector_store %arg4[%c0_4, %c0_5, %c0_6], %4 {strides = array<i32>} : memref<2x8x512xf32, #tpu.memory_space<vmem>>, vector<2x8x512xf32>,
    return
  }
  func.func @transform_0(%arg0: i32, %arg1: i32) -> (i32, i32, i32) {
    %c0_i32 = arith.constant 0 : i32
    %c0_i32_0 = arith.constant 0 : i32
    return %c0_i32, %arg0, %arg1 : i32, i32, i32
  }
  func.func @transform_1(%arg0: i32, %arg1: i32) -> (i32, i32) {
    %c0_i32 = arith.constant 0 : i32
    return %arg0, %arg1 : i32, i32
  }
  func.func @transform_2(%arg0: i32, %arg1: i32) -> (i32, i32, i32) {
    %c0_i32 = arith.constant 0 : i32
    %c0_i32_0 = arith.constant 0 : i32
    return %c0_i32, %arg0, %arg1 : i32, i32, i32
  }
}

</mosaic_0001>

<llo_original>
// kernel: tpu_custom_call.1
$region0: #{tpu_custom_call.1}
  #allocation0 [shape = 'u32[]', space=smem, size = 0x4, offset = 0x4, fixed_abs, tag = 'smem constant byte address 0x4 - core index']
  #allocation1 [shape = 'u32[144,128]{1,0:T(1,128)}', space=vmem, size = 0x12000, scoped, tag = 'internal scratch']
  %s0 = inlined_call_operand.hbm [shape: f32[2,8,512], index: 0, kind: input, shape index: {}, may-alias: {0,2}]
  %s1 = inlined_call_operand.hbm [shape: f32[1000,512], index: 1, kind: input, shape index: {}]
  %s2 = inlined_call_operand.hbm [shape: f32[2,8,512], index: 2, kind: output, shape index: {}, may-alias: {0,2}]
  %s3 = sld [smem:[#allocation0]]
  $region26: #{tpu_custom_call.1} parent=0
    _
  %s5 = ssub.s32 1, %s3
  %s6 = scalar_select 0, %s5, %s3
  $region1: #{tpu_custom_call.1} parent=0
    #allocation2 [shape = 'u8[32768]{0}', space=vmem, size = 0x8000, scoped, tag = 'input window, operand 0, single buffered']
    #allocation3 [shape = 's32[1]{0}', space=sflag, size = 0x4, scoped, tag = 'scoped memory for tpu_custom_call.1']
    #allocation4 [shape = 's32[1]{0}', space=sflag, size = 0x4, scoped, tag = 'scoped memory for tpu_custom_call.1']
    #allocation5 [shape = 'u8[16384]{0}', space=vmem, size = 0x4000, scoped, tag = 'input window, operand 1, single buffered']
    #allocation6 [shape = 's32[1]{0}', space=sflag, size = 0x4, scoped, tag = 'scoped memory for tpu_custom_call.1']
    #allocation7 [shape = 'u8[32768]{0}', space=vmem, size = 0x8000, scoped, tag = 'output window, operand 0, single buffered']
    %7 = vsyncpa [#allocation3], 0
    %8 = vsyncpa [#allocation6], 0
    %9 = vsyncpa [#allocation4], 0
    // Predicated region
    $region2: #{tpu_custom_call.1} parent=1 // pred_check
      _
    $region3: #{tpu_custom_call.1} parent=1 // pred_check_branch
      %11 = sbr.rel (0) target = $region5
    $region4: #{tpu_custom_call.1} parent=1 // pred_region
      %s13 = ssub.s32 1024, 1024
      %14 = vsyncadd [#allocation3], %s13
      %s15 = sshll.u32 [#allocation2], 4
      %s16 = int_to_ptr.vmem [resolvable:$true] %s15
      %21 = dma.hbm_to_vmem [thread:$0]  %s0, 1024, %s16, [#allocation3], 512, 512, 32
    $region5: #{tpu_custom_call.1} parent=1 // pred_fallthru
      _
    // Predicated region
    $region6: #{tpu_custom_call.1} parent=1 // pred_check
      _
    $region7: #{tpu_custom_call.1} parent=1 // pred_check_branch
      %23 = sbr.rel (0) target = $region9
    $region8: #{tpu_custom_call.1} parent=1 // pred_region
      %s25 = ssub.s32 512, 512
      %26 = vsyncadd [#allocation6], %s25
      %s28 = sshll.u32 [#allocation5], 4
      %s29 = int_to_ptr.vmem [resolvable:$true] %s28
      %31 = dma.hbm_to_vmem [thread:$0]  %s1, 512, %s29, [#allocation6]
    $region9: #{tpu_custom_call.1} parent=1 // pred_fallthru
      _
    // Predicated region
    $region10: #{tpu_custom_call.1} parent=1 // pred_check
      _
    $region11: #{tpu_custom_call.1} parent=1 // pred_check_branch
      %33 = sbr.rel (0) target = $region13
    $region12: #{tpu_custom_call.1} parent=1 // pred_region
      %34 = dma.done [#allocation3], 1024
    $region13: #{tpu_custom_call.1} parent=1 // pred_fallthru
      _
    // Predicated region
    $region14: #{tpu_custom_call.1} parent=1 // pred_check
      _
    $region15: #{tpu_custom_call.1} parent=1 // pred_check_branch
      %36 = sbr.rel (0) target = $region17
    $region16: #{tpu_custom_call.1} parent=1 // pred_region
      %37 = dma.done [#allocation6], 512
    $region17: #{tpu_custom_call.1} parent=1 // pred_fallthru
      _
    %v38 = vld [vmem:[#allocation2] sm:$0xff]
    %v39 = vld [vmem:[#allocation2 + $0x8] sm:$0xff]
    %v40 = vld [vmem:[#allocation2 + $0x10] sm:$0xff]
    %v41 = vld [vmem:[#allocation2 + $0x18] sm:$0xff]
    %v42 = vld [vmem:[#allocation2 + $0x20] sm:$0xff]
    %v43 = vld [vmem:[#allocation2 + $0x28] sm:$0xff]
    %v44 = vld [vmem:[#allocation2 + $0x30] sm:$0xff]
    %v45 = vld [vmem:[#allocation2 + $0x38] sm:$0xff]
    %v46 = vld [vmem:[#allocation5] sm:$0xff]
    %v47 = vld [vmem:[#allocation5 + $0x8] sm:$0xff]
    %v48 = vld [vmem:[#allocation5 + $0x10] sm:$0xff]
    %v49 = vld [vmem:[#allocation5 + $0x18] sm:$0xff]
    %v50 = vadd.f32 %v38, %v46
    %v51 = vadd.f32 %v39, %v47
    %v52 = vadd.f32 %v40, %v48
    %v53 = vadd.f32 %v41, %v49
    %v54 = vadd.f32 %v42, %v46
    %v55 = vadd.f32 %v43, %v47
    %v56 = vadd.f32 %v44, %v48
    %v57 = vadd.f32 %v45, %v49
    %58 = vst [vmem:[#allocation7] sm:$0xff] %v50
    %59 = vst [vmem:[#allocation7 + $0x8] sm:$0xff] %v51
    %60 = vst [vmem:[#allocation7 + $0x10] sm:$0xff] %v52
    %61 = vst [vmem:[#allocation7 + $0x18] sm:$0xff] %v53
    %62 = vst [vmem:[#allocation7 + $0x20] sm:$0xff] %v54
    %63 = vst [vmem:[#allocation7 + $0x28] sm:$0xff] %v55
    %64 = vst [vmem:[#allocation7 + $0x30] sm:$0xff] %v56
    %65 = vst [vmem:[#allocation7 + $0x38] sm:$0xff] %v57
    // Predicated region
    $region18: #{tpu_custom_call.1} parent=1 // pred_check
      _
    $region19: #{tpu_custom_call.1} parent=1 // pred_check_branch
      %67 = sbr.rel (0) target = $region21
    $region20: #{tpu_custom_call.1} parent=1 // pred_region
      %s69 = ssub.s32 1024, 1024
      %70 = vsyncadd [#allocation4], %s69
      %s71 = sshll.u32 [#allocation7], 4
      %s72 = int_to_ptr.vmem [resolvable:$true] %s71
      %77 = dma.vmem_to_hbm [thread:$0]  %s72, 1024, %s2, [#allocation4], 512, 512, 32
    $region21: #{tpu_custom_call.1} parent=1 // pred_fallthru
      _
    // Predicated region
    $region22: #{tpu_custom_call.1} parent=1 // pred_check
      _
    $region23: #{tpu_custom_call.1} parent=1 // pred_check_branch
      %79 = sbr.rel (0) target = $region25
    $region24: #{tpu_custom_call.1} parent=1 // pred_region
      %80 = dma.done [#allocation4], 1024
    $region25: #{tpu_custom_call.1} parent=1 // pred_fallthru
      _
    %81 = vsyncpa [#allocation3], 1
    %82 = vsyncpa [#allocation6], 1
    %83 = vsyncpa [#allocation4], 1

</llo_original>
